<compile_context>
chip_gen: v5e
topology: v5e:2x2
jax: 0.10.0
libtpu: 0.0.40
codegen_flags: <defaults>
</compile_context>

<pallas_src>
import jax
import jax.numpy as jnp
from jax.experimental import pallas as pl
from jax.experimental.pallas import tpu as pltpu

GAMMA = 2.0           # statically 2 -> strength-reduced to an explicit square
ALPHA = 0.25
LANES = 128
SUBLANES = 8
CHUNK_ROWS = 32       # rows per inner-loop iteration (4 vregs per f32 intermediate)
MAX_TILE_ROWS = 2048  # 2 inputs x 2 buffers x 2048 x 128 x 4B = 4 MiB of pipelined VMEM
NUM_CORES = 2         # "parallel" core-split axis; 2 TCs on v7x, serial no-op on v5e/v6e


def _make_focal_kernel(tile_rows: int):
    n_chunks = tile_rows // CHUNK_ROWS
    n_sub = CHUNK_ROWS // SUBLANES
    unroll = 2 if n_chunks >= 2 else 1

    def focal_kernel(yt_ref, yp_ref, bce_out_ref, fac_out_ref, bce_acc, fac_acc):
        step = pl.program_id(1)

        @pl.when(step == 0)
        def _():
            bce_acc[...] = jnp.zeros_like(bce_acc)
            fac_acc[...] = jnp.zeros_like(fac_acc)

        def body(j, carry):
            r0 = pl.multiple_of(j * CHUNK_ROWS, CHUNK_ROWS)
            yt = yt_ref[pl.ds(r0, CHUNK_ROWS), :].astype(jnp.float32)
            yp = yp_ref[pl.ds(r0, CHUNK_ROWS), :].astype(jnp.float32)

            # BCE term, un-negated (sign folded into the wrapper combine).
            # Two-log form kept so soft (non-binary) labels stay correct.
            log_p = jnp.maximum(jnp.log(yp), -100.0)
            log_1mp = jnp.maximum(jnp.log(1.0 - yp), -100.0)
            bce_raw = log_1mp + yt * (log_p - log_1mp)

            # Focal factor: (1 - p_t)^2 * alpha_w, strength-reduced.
            one_m_pt = yt + yp - 2.0 * (yt * yp)              # == 1 - p_t
            fac = (one_m_pt * one_m_pt) * (0.75 - 0.5 * yt)   # alpha_w = 0.75 - 0.5*y

            # Lane-wise VPU accumulation into the resident (8,128) accumulators.
            bce_acc[...] += bce_raw.reshape(n_sub, SUBLANES, LANES).sum(axis=0)
            fac_acc[...] += fac.reshape(n_sub, SUBLANES, LANES).sum(axis=0)
            return carry

        jax.lax.fori_loop(0, n_chunks, body, 0, unroll=unroll)

        # Per-core per-lane partials; cross-lane reduce + combine happen in the wrapper.
        @pl.when(step == pl.num_programs(1) - 1)
        def _():
            bce_out_ref[...] = bce_acc[...].reshape(1, SUBLANES, LANES)
            fac_out_ref[...] = fac_acc[...].reshape(1, SUBLANES, LANES)

    return focal_kernel


def focal_loss(y_true: jax.Array, y_pred: jax.Array) -> jax.Array:
    """Scalar focal loss; y_true/y_pred are same-shape probability arrays."""
    assert y_true.shape == y_pred.shape
    total = int(y_true.size)

    # --- Layout: flatten, zero-pad to (NUM_CORES * steps * tile_rows, 128). ---
    rows_needed = -(-total // LANES)
    rows_per_core = -(-rows_needed // NUM_CORES)
    tile_rows = min(MAX_TILE_ROWS, -(-rows_per_core // CHUNK_ROWS) * CHUNK_ROWS)
    steps = -(-rows_per_core // tile_rows)
    rows_padded = NUM_CORES * steps * tile_rows
    padded_total = rows_padded * LANES

    yt = y_true.reshape(-1)
    yp = y_pred.reshape(-1)
    pad = padded_total - total
    if pad:
        # Zero padding contributes exactly 0 to both partial sums:
        #   y=0, p=0  =>  bce_raw = log(1-0) + 0*(...) = 0  and  (1-p_t) = 0 => fac = 0.
        yt = jnp.pad(yt, (0, pad))
        yp = jnp.pad(yp, (0, pad))
    yt2 = yt.reshape(rows_padded, LANES)   # native dtype; kernel upcasts to f32
    yp2 = yp.reshape(rows_padded, LANES)

    in_bytes = yt2.size * yt2.dtype.itemsize + yp2.size * yp2.dtype.itemsize
    out_bytes = 2 * NUM_CORES * SUBLANES * LANES * 4

    bce_part, fac_part = pl.pallas_call(
        _make_focal_kernel(tile_rows),
        out_shape=(
            jax.ShapeDtypeStruct((NUM_CORES, SUBLANES, LANES), jnp.float32),
            jax.ShapeDtypeStruct((NUM_CORES, SUBLANES, LANES), jnp.float32),
        ),
        grid_spec=pltpu.PrefetchScalarGridSpec(
            num_scalar_prefetch=0,
            grid=(NUM_CORES, steps),
            in_specs=[
                pl.BlockSpec((tile_rows, LANES), lambda c, i: (c * steps + i, 0)),
                pl.BlockSpec((tile_rows, LANES), lambda c, i: (c * steps + i, 0)),
            ],
            out_specs=[
                pl.BlockSpec((1, SUBLANES, LANES), lambda c, i: (c, 0, 0)),
                pl.BlockSpec((1, SUBLANES, LANES), lambda c, i: (c, 0, 0)),
            ],
            scratch_shapes=[
                pltpu.VMEM((SUBLANES, LANES), jnp.float32),  # running Sigma bce_raw
                pltpu.VMEM((SUBLANES, LANES), jnp.float32),  # running Sigma focal factor
            ],
        ),
        compiler_params=pltpu.CompilerParams(
            dimension_semantics=("parallel", "arbitrary"),
        ),
        cost_estimate=pl.CostEstimate(
            flops=20 * padded_total,
            transcendentals=2 * padded_total,
            bytes_accessed=in_bytes + out_bytes,
        ),
    )(yt2, yp2)

    # loss = mean(fac) * mean(-bce_raw) = -(Sigma fac * Sigma bce_raw) / N^2,
    # with N = the true (un-padded) element count.
    inv_n = 1.0 / float(total)
    bce_sum = jnp.sum(bce_part)
    fac_sum = jnp.sum(fac_part)
    return -(fac_sum * inv_n) * (bce_sum * inv_n)


def focal_loss_ref(y_true, y_pred):
    log_p = jnp.maximum(jnp.log(y_pred), -100.0)
    log_1mp = jnp.maximum(jnp.log(1.0 - y_pred), -100.0)
    bce = jnp.mean(-(y_true * log_p + (1.0 - y_true) * log_1mp))
    p_t = y_true * y_pred + (1.0 - y_true) * (1.0 - y_pred)
    fac = ((1.0 - p_t) ** GAMMA) * (y_true * ALPHA + (1.0 - y_true) * (1.0 - ALPHA))
    return jnp.mean(fac * bce)


if __name__ == "__main__":
    key = jax.random.PRNGKey(0)
    k1, k2 = jax.random.split(key)
    shape = (2, 4, 16, 16)  # NCHW; 2048 elements
    # Binary targets and probability predictions (BCELoss expects probabilities).
    y_true = (jax.random.uniform(k1, shape) > 0.5).astype(jnp.float32)
    y_pred = jax.nn.sigmoid(jax.random.normal(k2, shape)).astype(jnp.float32)

    loss = focal_loss(y_true, y_pred)
    jax.block_until_ready(loss)

    ref = focal_loss_ref(y_true, y_pred)
    assert jnp.allclose(loss, ref, rtol=1e-5, atol=1e-6), (loss, ref)

    print("KERNEL_OK")
</pallas_src>

<mosaic_0001>
module attributes {stable_mosaic.version = 11 : i64} {
  func.func @focal_kernel(%arg0: i32, %arg1: i32, %arg2: memref<32x128xf32, #tpu.memory_space<vmem>>, %arg3: memref<32x128xf32, #tpu.memory_space<vmem>>, %arg4: memref<1x8x128xf32, #tpu.memory_space<vmem>>, %arg5: memref<1x8x128xf32, #tpu.memory_space<vmem>>, %arg6: memref<8x128xf32, #tpu.memory_space<vmem>>, %arg7: memref<8x128xf32, #tpu.memory_space<vmem>>) attributes {dimension_semantics = [#tpu.dimension_semantics<parallel>, #tpu.dimension_semantics<arbitrary>], iteration_bounds = array<i64: 2, 1>, scalar_prefetch = 0 : i64, scratch_operands = 2 : i64, tpu.core_type = #tpu.core_type<tc>, window_params = [{transform_indices = @transform_0, window_bounds = array<i64: 32, 128>}, {transform_indices = @transform_1, window_bounds = array<i64: 32, 128>}, {transform_indices = @transform_2, window_bounds = array<i64: 1, 8, 128>}, {transform_indices = @transform_3, window_bounds = array<i64: 1, 8, 128>}]} {
    %c0_i32 = arith.constant 0 : i32
    %0 = arith.cmpi eq, %arg1, %c0_i32 : i32
    %1 = arith.extui %0 : i1 to i32
    %c0_i32_0 = arith.constant 0 : i32
    %2 = arith.cmpi ne, %1, %c0_i32_0 : i32
    scf.if %2 {
      %cst_20 = arith.constant 0.000000e+00 : f32
      %44 = vector.broadcast %cst_20 : f32 to vector<8x128xf32>
      %c0_21 = arith.constant 0 : index
      %c0_22 = arith.constant 0 : index
      %45 = vector.load %arg6[%c0_21, %c0_22] : memref<8x128xf32, #tpu.memory_space<vmem>>, vector<8x128xf32>
      tpu.vector_store %arg6[%c0_21, %c0_22], %44 {strides = array<i32>} : memref<8x128xf32, #tpu.memory_space<vmem>>, vector<8x128xf32>,
      %cst_23 = arith.constant 0.000000e+00 : f32
      %46 = vector.broadcast %cst_23 : f32 to vector<8x128xf32>
      %c0_24 = arith.constant 0 : index
      %c0_25 = arith.constant 0 : index
      %47 = vector.load %arg7[%c0_24, %c0_25] : memref<8x128xf32, #tpu.memory_space<vmem>>, vector<8x128xf32>
      tpu.vector_store %arg7[%c0_24, %c0_25], %46 {strides = array<i32>} : memref<8x128xf32, #tpu.memory_space<vmem>>, vector<8x128xf32>,
    } else {
    }
    %c0_i32_1 = arith.constant 0 : i32
    %c32_i32 = arith.constant 32 : i32
    %3 = arith.muli %c0_i32_1, %c32_i32 : i32
    %4 = tpu.assume_multiple %3, 32 : i32
    %5 = arith.index_cast %4 : i32 to index
    %c0 = arith.constant 0 : index
    %6 = vector.load %arg2[%5, %c0] : memref<32x128xf32, #tpu.memory_space<vmem>>, vector<32x128xf32>
    %7 = arith.index_cast %4 : i32 to index
    %c0_2 = arith.constant 0 : index
    %8 = vector.load %arg3[%7, %c0_2] : memref<32x128xf32, #tpu.memory_space<vmem>>, vector<32x128xf32>
    %9 = math.log %8 : vector<32x128xf32>
    %cst = arith.constant -1.000000e+02 : f32
    %10 = vector.broadcast %cst : f32 to vector<32x128xf32>
    %11 = arith.maximumf %9, %10 : vector<32x128xf32>
    %cst_3 = arith.constant 1.000000e+00 : f32
    %12 = vector.broadcast %cst_3 : f32 to vector<32x128xf32>
    %13 = arith.subf %12, %8 : vector<32x128xf32>
    %14 = math.log %13 : vector<32x128xf32>
    %cst_4 = arith.constant -1.000000e+02 : f32
    %15 = vector.broadcast %cst_4 : f32 to vector<32x128xf32>
    %16 = arith.maximumf %14, %15 : vector<32x128xf32>
    %17 = arith.subf %11, %16 : vector<32x128xf32>
    %18 = arith.mulf %6, %17 : vector<32x128xf32>
    %19 = arith.addf %16, %18 : vector<32x128xf32>
    %20 = arith.addf %6, %8 : vector<32x128xf32>
    %21 = arith.mulf %6, %8 : vector<32x128xf32>
    %cst_5 = arith.constant 2.000000e+00 : f32
    %22 = vector.broadcast %cst_5 : f32 to vector<32x128xf32>
    %23 = arith.mulf %22, %21 : vector<32x128xf32>
    %24 = arith.subf %20, %23 : vector<32x128xf32>
    %25 = arith.mulf %24, %24 : vector<32x128xf32>
    %cst_6 = arith.constant 5.000000e-01 : f32
    %26 = vector.broadcast %cst_6 : f32 to vector<32x128xf32>
    %27 = arith.mulf %26, %6 : vector<32x128xf32>
    %cst_7 = arith.constant 7.500000e-01 : f32
    %28 = vector.broadcast %cst_7 : f32 to vector<32x128xf32>
    %29 = arith.subf %28, %27 : vector<32x128xf32>
    %30 = arith.mulf %25, %29 : vector<32x128xf32>
    %c0_8 = arith.constant 0 : index
    %c0_9 = arith.constant 0 : index
    %31 = vector.load %arg6[%c0_8, %c0_9] : memref<8x128xf32, #tpu.memory_space<vmem>>, vector<8x128xf32>
    %32 = vector.shape_cast %19 : vector<32x128xf32> to vector<4x8x128xf32>
    %cst_10 = arith.constant dense<0.000000e+00> : vector<8x128xf32>
    %33 = vector.multi_reduction <add>, %32, %cst_10 [0] : vector<4x8x128xf32> to vector<8x128xf32>
    %34 = arith.addf %31, %33 : vector<8x128xf32>
    %c0_11 = arith.constant 0 : index
    %c0_12 = arith.constant 0 : index
    %35 = vector.load %arg6[%c0_11, %c0_12] : memref<8x128xf32, #tpu.memory_space<vmem>>, vector<8x128xf32>
    tpu.vector_store %arg6[%c0_11, %c0_12], %34 {strides = array<i32>} : memref<8x128xf32, #tpu.memory_space<vmem>>, vector<8x128xf32>,
    %c0_13 = arith.constant 0 : index
    %c0_14 = arith.constant 0 : index
    %36 = vector.load %arg7[%c0_13, %c0_14] : memref<8x128xf32, #tpu.memory_space<vmem>>, vector<8x128xf32>
    %37 = vector.shape_cast %30 : vector<32x128xf32> to vector<4x8x128xf32>
    %cst_15 = arith.constant dense<0.000000e+00> : vector<8x128xf32>
    %38 = vector.multi_reduction <add>, %37, %cst_15 [0] : vector<4x8x128xf32> to vector<8x128xf32>
    %39 = arith.addf %36, %38 : vector<8x128xf32>
    %c0_16 = arith.constant 0 : index
    %c0_17 = arith.constant 0 : index
    %40 = vector.load %arg7[%c0_16, %c0_17] : memref<8x128xf32, #tpu.memory_space<vmem>>, vector<8x128xf32>
    tpu.vector_store %arg7[%c0_16, %c0_17], %39 {strides = array<i32>} : memref<8x128xf32, #tpu.memory_space<vmem>>, vector<8x128xf32>,
    %c1_i32 = arith.constant 1 : i32
    %c0_i32_18 = arith.constant 0 : i32
    %41 = arith.cmpi eq, %arg1, %c0_i32_18 : i32
    %42 = arith.extui %41 : i1 to i32
    %c0_i32_19 = arith.constant 0 : i32
    %43 = arith.cmpi ne, %42, %c0_i32_19 : i32
    scf.if %43 {
      %c0_20 = arith.constant 0 : index
      %c0_21 = arith.constant 0 : index
      %44 = vector.load %arg6[%c0_20, %c0_21] : memref<8x128xf32, #tpu.memory_space<vmem>>, vector<8x128xf32>
      %45 = vector.shape_cast %44 : vector<8x128xf32> to vector<1x8x128xf32>
      %c0_22 = arith.constant 0 : index
      %c0_23 = arith.constant 0 : index
      %c0_24 = arith.constant 0 : index
      %46 = vector.load %arg4[%c0_22, %c0_23, %c0_24] : memref<1x8x128xf32, #tpu.memory_space<vmem>>, vector<1x8x128xf32>
      tpu.vector_store %arg4[%c0_22, %c0_23, %c0_24], %45 {strides = array<i32>} : memref<1x8x128xf32, #tpu.memory_space<vmem>>, vector<1x8x128xf32>,
      %c0_25 = arith.constant 0 : index
      %c0_26 = arith.constant 0 : index
      %47 = vector.load %arg7[%c0_25, %c0_26] : memref<8x128xf32, #tpu.memory_space<vmem>>, vector<8x128xf32>
      %48 = vector.shape_cast %47 : vector<8x128xf32> to vector<1x8x128xf32>
      %c0_27 = arith.constant 0 : index
      %c0_28 = arith.constant 0 : index
      %c0_29 = arith.constant 0 : index
      %49 = vector.load %arg5[%c0_27, %c0_28, %c0_29] : memref<1x8x128xf32, #tpu.memory_space<vmem>>, vector<1x8x128xf32>
      tpu.vector_store %arg5[%c0_27, %c0_28, %c0_29], %48 {strides = array<i32>} : memref<1x8x128xf32, #tpu.memory_space<vmem>>, vector<1x8x128xf32>,
    } else {
    }
    return
  }
  func.func @transform_0(%arg0: i32, %arg1: i32) -> (i32, i32) {
    %c1_i32 = arith.constant 1 : i32
    %0 = arith.muli %arg0, %c1_i32 : i32
    %1 = arith.addi %0, %arg1 : i32
    %c0_i32 = arith.constant 0 : i32
    %c0_i32_0 = arith.constant 0 : i32
    return %1, %c0_i32 : i32, i32
  }
  func.func @transform_1(%arg0: i32, %arg1: i32) -> (i32, i32) {
    %c1_i32 = arith.constant 1 : i32
    %0 = arith.muli %arg0, %c1_i32 : i32
    %1 = arith.addi %0, %arg1 : i32
    %c0_i32 = arith.constant 0 : i32
    %c0_i32_0 = arith.constant 0 : i32
    return %1, %c0_i32 : i32, i32
  }
  func.func @transform_2(%arg0: i32, %arg1: i32) -> (i32, i32, i32) {
    %c0_i32 = arith.constant 0 : i32
    %c0_i32_0 = arith.constant 0 : i32
    %c0_i32_1 = arith.constant 0 : i32
    return %arg0, %c0_i32, %c0_i32_0 : i32, i32, i32
  }
  func.func @transform_3(%arg0: i32, %arg1: i32) -> (i32, i32, i32) {
    %c0_i32 = arith.constant 0 : i32
    %c0_i32_0 = arith.constant 0 : i32
    %c0_i32_1 = arith.constant 0 : i32
    return %arg0, %c0_i32, %c0_i32_0 : i32, i32, i32
  }
}

</mosaic_0001>

<llo_original>
// kernel: tpu_custom_call.1
$region0: #{tpu_custom_call.1}
  #allocation0 [shape = 'u32[]', space=smem, size = 0x4, offset = 0x4, fixed_abs, tag = 'smem constant byte address 0x4 - core index']
  #allocation1 [shape = 'u32[72,128]{1,0:T(1,128)}', space=vmem, size = 0x9000, scoped, tag = 'internal scratch']
  #allocation2 [shape = 'f32[8,128]{1,0:T(8,128)}', space=vmem, size = 0x1000, scoped, tag = 'scratch operand']
  #allocation3 [shape = 'f32[8,128]{1,0:T(8,128)}', space=vmem, size = 0x1000, scoped, tag = 'scratch operand']
  %s0 = inlined_call_operand.hbm [shape: f32[64,128], index: 0, kind: input, shape index: {}]
  %s1 = inlined_call_operand.hbm [shape: f32[64,128], index: 1, kind: input, shape index: {}]
  %s2 = inlined_call_operand.hbm [shape: f32[2,8,128], index: 2, kind: output, shape index: {0}]
  %s3 = inlined_call_operand.hbm [shape: f32[2,8,128], index: 3, kind: output, shape index: {1}]
  %4 = xla_tuple %s2, %s3
  %s5 = sld [smem:[#allocation0]]
  $region65: #{tpu_custom_call.1} parent=0
    _
  %s7 = ssub.s32 1, %s5
  %s8 = scalar_select 0, %s7, %s5
  $region1: #{tpu_custom_call.1} parent=0
    #allocation4 [shape = 'u8[32768]{0}', space=vmem, size = 0x8000, scoped, tag = 'input window, operand 0']
    #allocation5 [shape = 's32[2]{0}', space=sflag, size = 0x8, scoped, tag = 'scoped memory for tpu_custom_call.1']
    #allocation6 [shape = 's32[2]{0}', space=sflag, size = 0x8, scoped, tag = 'scoped memory for tpu_custom_call.1']
    #allocation7 [shape = 'u8[32768]{0}', space=vmem, size = 0x8000, scoped, tag = 'input window, operand 1']
    #allocation8 [shape = 's32[2]{0}', space=sflag, size = 0x8, scoped, tag = 'scoped memory for tpu_custom_call.1']
    #allocation9 [shape = 'u8[8192]{0}', space=vmem, size = 0x2000, scoped, tag = 'output window, operand 0']
    #allocation10 [shape = 'u8[8192]{0}', space=vmem, size = 0x2000, scoped, tag = 'output window, operand 1']
    #allocation11 [shape = 's32[2]{0}', space=sflag, size = 0x8, scoped, tag = 'scoped memory for tpu_custom_call.1']
    %9 = vsyncpa [#allocation5], 0
    %s10 = scalar_lea.sflag [#allocation5], 1
    %11 = vsyncpa %s10, 0
    %12 = vsyncpa [#allocation8], 0
    %s13 = scalar_lea.sflag [#allocation8], 1
    %14 = vsyncpa %s13, 0
    %15 = vsyncpa [#allocation6], 0
    %s16 = scalar_lea.sflag [#allocation6], 1
    %17 = vsyncpa %s16, 0
    %18 = vsyncpa [#allocation11], 0
    %s19 = scalar_lea.sflag [#allocation11], 1
    %20 = vsyncpa %s19, 0
    loop: start=0, step=1, limit=4
    $region2: #{tpu_custom_call.1} parent=1 // loop_pre_header
      _
    $region3: #{tpu_custom_call.1} parent=1 // loop_header
      %s22 = sphi 0, %s26
      %p23 = scmp.ge.s32.totalorder %s22, 4
      %s29 = sphi 0, %s41
      %s30 = sphi 0, %s37
      %s31 = sphi 0, %s29
      %s32 = sphi 0, %s30
      %s33 = sphi 0, %s31
      %s34 = sphi 0, %s32
      %s46 = sphi 0, %s48
      %s49 = sphi 0, %s46
      %s50 = sphi 0, %s49
      %s66 = sphi 0, %s50
      %s74 = sphi 0, %s76
      %s77 = sphi 0, %s74
      %s78 = sphi 0, %s77
      %s94 = sphi 0, %s78
      %s100 = sphi 0, %s102
      %s103 = sphi 0, %s100
      %s104 = sphi 0, %s103
      %s120 = sphi 0, %s104
      %s126 = sphi 0, %s128
      %s129 = sphi 0, %s126
      %s130 = sphi 0, %s129
      %s146 = sphi 0, %s130
    $region4: #{tpu_custom_call.1} parent=1 // loop_header_branch
      %25 = sbr.rel (%p23) target = $region8
    $region5: #{tpu_custom_call.1} parent=1 // loop_body
      %s27 = ssub.s32 %s22, 1
      %s28 = ssub.s32 %s22, 2
      %s35 = sadd.s32 1, %s30
      %p36 = scmp.ge.s32.totalorder %s35, 1
      %s37 = scalar_select %p36, 0, %s35
      %s38 = sadd.s32 1, %s29
      %s39 = scalar_select %p36, %s38, %s29
      %p40 = scmp.ge.s32.totalorder %s39, 2
      %s41 = scalar_select %p40, 0, %s39
      %s42 = sadd.s32 %s29, %s30
      %s43 = sadd.s32 %s41, %s37
      %s44 = ssub.s32 %s42, %s43
      %p45 = scmp.eq.s32.totalorder %s44, 0
      %s47 = sadd.s32 %s46, 1
      %s48 = scalar_select %p45, %s46, %s47
      %p51 = pneg %p45
      %p52 = scmp.eq.s32.totalorder %s22, 1
      %p53 = por %p51, %p52
      %p54 = scmp.ne.s32.totalorder %s46, %s49
      %p55 = scmp.eq.s32.totalorder %s22, 0
      %p56 = por %p54, %p55
      %p57 = scmp.ne.s32.totalorder %s46, %s49
      %p58 = scmp.eq.s32.totalorder %s27, 1
      %p59 = por %p57, %p58
      %p60 = scmp.ne.s32.totalorder %s49, %s50
      %p61 = scmp.eq.s32.totalorder %s27, 0
      %p62 = por %p60, %p61
      %p63 = scmp.ne.s32.totalorder %s49, %s50
      %p64 = scmp.eq.s32.totalorder %s28, 1
      %p65 = por %p63, %p64
      %p67 = scmp.ne.s32.totalorder %s50, %s66
      %p68 = scmp.eq.s32.totalorder %s28, 0
      %p69 = por %p67, %p68
      %s70 = sadd.s32 %s29, %s30
      %s71 = sadd.s32 %s41, %s37
      %s72 = ssub.s32 %s70, %s71
      %p73 = scmp.eq.s32.totalorder %s72, 0
      %s75 = sadd.s32 %s74, 1
      %s76 = scalar_select %p73, %s74, %s75
      %p79 = pneg %p73
      %p80 = scmp.eq.s32.totalorder %s22, 1
      %p81 = por %p79, %p80
      %p82 = scmp.ne.s32.totalorder %s74, %s77
      %p83 = scmp.eq.s32.totalorder %s22, 0
      %p84 = por %p82, %p83
      %p85 = scmp.ne.s32.totalorder %s74, %s77
      %p86 = scmp.eq.s32.totalorder %s27, 1
      %p87 = por %p85, %p86
      %p88 = scmp.ne.s32.totalorder %s77, %s78
      %p89 = scmp.eq.s32.totalorder %s27, 0
      %p90 = por %p88, %p89
      %p91 = scmp.ne.s32.totalorder %s77, %s78
      %p92 = scmp.eq.s32.totalorder %s28, 1
      %p93 = por %p91, %p92
      %p95 = scmp.ne.s32.totalorder %s78, %s94
      %p96 = scmp.eq.s32.totalorder %s28, 0
      %p97 = por %p95, %p96
      %s98 = ssub.s32 %s29, %s41
      %p99 = scmp.eq.s32.totalorder %s98, 0
      %s101 = sadd.s32 %s100, 1
      %s102 = scalar_select %p99, %s100, %s101
      %p105 = pneg %p99
      %p106 = scmp.eq.s32.totalorder %s22, 1
      %p107 = por %p105, %p106
      %p108 = scmp.ne.s32.totalorder %s100, %s103
      %p109 = scmp.eq.s32.totalorder %s22, 0
      %p110 = por %p108, %p109
      %p111 = scmp.ne.s32.totalorder %s100, %s103
      %p112 = scmp.eq.s32.totalorder %s27, 1
      %p113 = por %p111, %p112
      %p114 = scmp.ne.s32.totalorder %s103, %s104
      %p115 = scmp.eq.s32.totalorder %s27, 0
      %p116 = por %p114, %p115
      %p117 = scmp.ne.s32.totalorder %s103, %s104
      %p118 = scmp.eq.s32.totalorder %s28, 1
      %p119 = por %p117, %p118
      %p121 = scmp.ne.s32.totalorder %s104, %s120
      %p122 = scmp.eq.s32.totalorder %s28, 0
      %p123 = por %p121, %p122
      %s124 = ssub.s32 %s29, %s41
      %p125 = scmp.eq.s32.totalorder %s124, 0
      %s127 = sadd.s32 %s126, 1
      %s128 = scalar_select %p125, %s126, %s127
      %p131 = pneg %p125
      %p132 = scmp.eq.s32.totalorder %s22, 1
      %p133 = por %p131, %p132
      %p134 = scmp.ne.s32.totalorder %s126, %s129
      %p135 = scmp.eq.s32.totalorder %s22, 0
      %p136 = por %p134, %p135
      %p137 = scmp.ne.s32.totalorder %s126, %s129
      %p138 = scmp.eq.s32.totalorder %s27, 1
      %p139 = por %p137, %p138
      %p140 = scmp.ne.s32.totalorder %s129, %s130
      %p141 = scmp.eq.s32.totalorder %s27, 0
      %p142 = por %p140, %p141
      %p143 = scmp.ne.s32.totalorder %s129, %s130
      %p144 = scmp.eq.s32.totalorder %s28, 1
      %p145 = por %p143, %p144
      %p147 = scmp.ne.s32.totalorder %s130, %s146
      %p148 = scmp.eq.s32.totalorder %s28, 0
      %p149 = por %p147, %p148
      %p150 = scmp.le.s32.totalorder 1, %s22
      %p151 = scmp.lt.s32.totalorder %s22, 3
      %p152 = pnand %p150, %p151
      %p153 = pneg %p152
      // Predicated region
      $region9: #{tpu_custom_call.1} parent=5 // pred_check
        _
      $region10: #{tpu_custom_call.1} parent=5 // pred_check_branch
        %155 = sbr.rel (%p152) target = $region12
      $region11: #{tpu_custom_call.1} parent=5 // pred_region
        %s156 = ssub.s32 %s22, 1
      $region12: #{tpu_custom_call.1} parent=5 // pred_fallthru
        _
      %p157 = scmp.lt.s32.totalorder %s22, 2
      // Predicated region
      $region13: #{tpu_custom_call.1} parent=5 // pred_check
        %p158 = pneg %p157
      $region14: #{tpu_custom_call.1} parent=5 // pred_check_branch
        %160 = sbr.rel (%p158) target = $region16
      $region15: #{tpu_custom_call.1} parent=5 // pred_region
        // Predicated region
        $region17: #{tpu_custom_call.1} parent=15 // pred_check
          %p161 = pneg %p56
        $region18: #{tpu_custom_call.1} parent=15 // pred_check_branch
          %163 = sbr.rel (%p161) target = $region20
        $region19: #{tpu_custom_call.1} parent=15 // pred_region
          %s164 = sand.u32 %s46, 1
          %s165 = scalar_lea.sflag [#allocation5], %s164
          %s166 = sand.u32 %s46, 1
          %s167 = smul.addr %s166, 32
          %s168 = scalar_lea.vmem [#allocation4], %s167
          %s169 = sadd.s32 %s29, %s30
          %s170 = smul.u32 4, %s169
          %172 = vsyncadd %s165, 0
          %s173 = smul.addr %s170, 8
          %s174 = scalar_lea.hbm %s0, %s173
          %s175 = sshll.u32 %s174, 4
          %s176 = int_to_ptr.hbm [resolvable:$true] %s175
          %s177 = sshll.u32 %s168, 4
          %s178 = int_to_ptr.vmem [resolvable:$true] %s177
          %183 = dma.hbm_to_vmem [thread:$0]  %s176, 512, %s178, %s165, 128, 128, 8
        $region20: #{tpu_custom_call.1} parent=15 // pred_fallthru
          _
        // Predicated region
        $region21: #{tpu_custom_call.1} parent=15 // pred_check
          %p184 = pneg %p84
        $region22: #{tpu_custom_call.1} parent=15 // pred_check_branch
          %186 = sbr.rel (%p184) target = $region24
        $region23: #{tpu_custom_call.1} parent=15 // pred_region
          %s187 = sand.u32 %s74, 1
          %s188 = scalar_lea.sflag [#allocation8], %s187
          %s189 = sand.u32 %s74, 1
          %s190 = smul.addr %s189, 32
          %s191 = scalar_lea.vmem [#allocation7], %s190
          %s192 = sadd.s32 %s29, %s30
          %s193 = smul.u32 4, %s192
          %195 = vsyncadd %s188, 0
          %s196 = smul.addr %s193, 8
          %s197 = scalar_lea.hbm %s1, %s196
          %s198 = sshll.u32 %s197, 4
          %s199 = int_to_ptr.hbm [resolvable:$true] %s198
          %s200 = sshll.u32 %s191, 4
          %s201 = int_to_ptr.vmem [resolvable:$true] %s200
          %206 = dma.hbm_to_vmem [thread:$0]  %s199, 512, %s201, %s188, 128, 128, 8
        $region24: #{tpu_custom_call.1} parent=15 // pred_fallthru
          _
      $region16: #{tpu_custom_call.1} parent=5 // pred_fallthru
        _
      %p207 = scmp.le.s32.totalorder 1, %s22
      %p208 = scmp.lt.s32.totalorder %s22, 3
      %p209 = pnand %p207, %p208
      %p210 = pneg %p209
      // Predicated region
      $region25: #{tpu_custom_call.1} parent=5 // pred_check
        _
      $region26: #{tpu_custom_call.1} parent=5 // pred_check_branch
        %212 = sbr.rel (%p209) target = $region28
      $region27: #{tpu_custom_call.1} parent=5 // pred_region
        %s213 = ssub.s32 %s22, 1
        %s214 = sand.u32 %s49, 1
        %s215 = scalar_lea.sflag [#allocation5], %s214
        %s216 = sand.u32 %s49, 1
        %s217 = smul.addr %s216, 32
        %s218 = scalar_lea.vmem [#allocation4], %s217
        // Predicated region
        $region29: #{tpu_custom_call.1} parent=27 // pred_check
          %p219 = pneg %p62
        $region30: #{tpu_custom_call.1} parent=27 // pred_check_branch
          %221 = sbr.rel (%p219) target = $region32
        $region31: #{tpu_custom_call.1} parent=27 // pred_region
          %223 = dma.done %s215, 512
        $region32: #{tpu_custom_call.1} parent=27 // pred_fallthru
          _
        %s224 = sand.u32 %s77, 1
        %s225 = scalar_lea.sflag [#allocation8], %s224
        %s226 = sand.u32 %s77, 1
        %s227 = smul.addr %s226, 32
        %s228 = scalar_lea.vmem [#allocation7], %s227
        // Predicated region
        $region33: #{tpu_custom_call.1} parent=27 // pred_check
          %p229 = pneg %p90
        $region34: #{tpu_custom_call.1} parent=27 // pred_check_branch
          %231 = sbr.rel (%p229) target = $region36
        $region35: #{tpu_custom_call.1} parent=27 // pred_region
          %233 = dma.done %s225, 512
        $region36: #{tpu_custom_call.1} parent=27 // pred_fallthru
          _
        %s234 = sand.u32 %s49, 1
        %s235 = scalar_lea.sflag [#allocation5], %s234
        %s236 = sand.u32 %s49, 1
        %s237 = smul.addr %s236, 32
        %s238 = scalar_lea.vmem [#allocation4], %s237
        %p239 = pneg %p62
        %p240 = pneg %p59
        %s241 = sand.u32 %s77, 1
        %s242 = scalar_lea.sflag [#allocation8], %s241
        %s243 = sand.u32 %s77, 1
        %s244 = smul.addr %s243, 32
        %s245 = scalar_lea.vmem [#allocation7], %s244
        %p246 = pneg %p90
        %p247 = pneg %p87
        %p248 = pneg %p116
        %p249 = pneg %p113
        %s250 = sand.u32 %s103, 1
        %s251 = scalar_lea.sflag [#allocation6], %s250
        %s252 = sand.u32 %s103, 1
        %s253 = smul.addr %s252, 8
        %s254 = scalar_lea.vmem [#allocation9], %s253
        %p255 = pneg %p142
        %p256 = pneg %p139
        %s257 = sand.u32 %s129, 1
        %s258 = scalar_lea.sflag [#allocation11], %s257
        %s259 = sand.u32 %s129, 1
        %s260 = smul.addr %s259, 8
        %s261 = scalar_lea.vmem [#allocation10], %s260
        %s262 = sadd.s32 %s31, %s32
        %s263 = smul.u32 4, %s262
        %s264 = sadd.s32 %s31, %s32
        %s265 = smul.u32 4, %s264
        %p266 = scmp.eq.s32.totalorder %s32, 0
        // Predicated region
        $region37: #{tpu_custom_call.1} parent=27 // pred_check
          %p267 = pneg %p266
        $region38: #{tpu_custom_call.1} parent=27 // pred_check_branch
          %269 = sbr.rel (%p267) target = $region40
        $region39: #{tpu_custom_call.1} parent=27 // pred_region
          %270 = vst [vmem:[#allocation2] sm:$0xff] 0.0
          %271 = vst [vmem:[#allocation3] sm:$0xff] 0.0
        $region40: #{tpu_custom_call.1} parent=27 // pred_fallthru
          _
        %v272 = vld [vmem:[%s218] sm:$0xff]
        %v273 = vld [vmem:[%s218 + $0x8] sm:$0xff]
        %v274 = vld [vmem:[%s218 + $0x10] sm:$0xff]
        %v275 = vld [vmem:[%s218 + $0x18] sm:$0xff]
        %v276 = vld [vmem:[%s228] sm:$0xff]
        %v277 = vld [vmem:[%s228 + $0x8] sm:$0xff]
        %v278 = vld [vmem:[%s228 + $0x10] sm:$0xff]
        %v279 = vld [vmem:[%s228 + $0x18] sm:$0xff]
        %v280 = vlog2.pop %v276
        %v281 = vmul.f32 %v280, 0.6931472
        %v282 = vlog2.pop %v277
        %v283 = vmul.f32 %v282, 0.6931472
        %v284 = vlog2.pop %v278
        %v285 = vmul.f32 %v284, 0.6931472
        %v286 = vlog2.pop %v279
        %v287 = vmul.f32 %v286, 0.6931472
        %v288 = vmax.f32 %v281, -100.0
        %v289 = vmax.f32 %v283, -100.0
        %v290 = vmax.f32 %v285, -100.0
        %v291 = vmax.f32 %v287, -100.0
        %v292 = vsub.f32 1.0, %v276
        %v293 = vsub.f32 1.0, %v277
        %v294 = vsub.f32 1.0, %v278
        %v295 = vsub.f32 1.0, %v279
        %v296 = vlog2.pop %v292
        %v297 = vmul.f32 %v296, 0.6931472
        %v298 = vlog2.pop %v293
        %v299 = vmul.f32 %v298, 0.6931472
        %v300 = vlog2.pop %v294
        %v301 = vmul.f32 %v300, 0.6931472
        %v302 = vlog2.pop %v295
        %v303 = vmul.f32 %v302, 0.6931472
        %v304 = vmax.f32 %v297, -100.0
        %v305 = vmax.f32 %v299, -100.0
        %v306 = vmax.f32 %v301, -100.0
        %v307 = vmax.f32 %v303, -100.0
        %v308 = vsub.f32 %v288, %v304
        %v309 = vsub.f32 %v289, %v305
        %v310 = vsub.f32 %v290, %v306
        %v311 = vsub.f32 %v291, %v307
        %v312 = vmul.f32 %v272, %v308
        %v313 = vmul.f32 %v273, %v309
        %v314 = vmul.f32 %v274, %v310
        %v315 = vmul.f32 %v275, %v311
        %v316 = vadd.f32 %v304, %v312
        %v317 = vadd.f32 %v305, %v313
        %v318 = vadd.f32 %v306, %v314
        %v319 = vadd.f32 %v307, %v315
        %v320 = vadd.f32 %v272, %v276
        %v321 = vadd.f32 %v273, %v277
        %v322 = vadd.f32 %v274, %v278
        %v323 = vadd.f32 %v275, %v279
        %v324 = vmul.f32 %v272, %v276
        %v325 = vmul.f32 %v273, %v277
        %v326 = vmul.f32 %v274, %v278
        %v327 = vmul.f32 %v275, %v279
        %v328 = vmul.f32 %v324, 2.0
        %v329 = vmul.f32 %v325, 2.0
        %v330 = vmul.f32 %v326, 2.0
        %v331 = vmul.f32 %v327, 2.0
        %v332 = vsub.f32 %v320, %v328
        %v333 = vsub.f32 %v321, %v329
        %v334 = vsub.f32 %v322, %v330
        %v335 = vsub.f32 %v323, %v331
        %v336 = vmul.f32 %v332, %v332
        %v337 = vmul.f32 %v333, %v333
        %v338 = vmul.f32 %v334, %v334
        %v339 = vmul.f32 %v335, %v335
        %v340 = vmul.f32 %v272, 0.5
        %v341 = vmul.f32 %v273, 0.5
        %v342 = vmul.f32 %v274, 0.5
        %v343 = vmul.f32 %v275, 0.5
        %v344 = vsub.f32 0.75, %v340
        %v345 = vsub.f32 0.75, %v341
        %v346 = vsub.f32 0.75, %v342
        %v347 = vsub.f32 0.75, %v343
        %v348 = vmul.f32 %v336, %v344
        %v349 = vmul.f32 %v337, %v345
        %v350 = vmul.f32 %v338, %v346
        %v351 = vmul.f32 %v339, %v347
        %v352 = vld [vmem:[#allocation2] sm:$0xff]
        %v353 = vadd.f32 %v316, %v317
        %v354 = vadd.f32 %v353, %v318
        %v355 = vadd.f32 %v354, %v319
        %v356 = vadd.f32 %v352, %v355
        %357 = vst [vmem:[#allocation2] sm:$0xff] %v356
        %v358 = vld [vmem:[#allocation3] sm:$0xff]
        %v359 = vadd.f32 %v348, %v349
        %v360 = vadd.f32 %v359, %v350
        %v361 = vadd.f32 %v360, %v351
        %v362 = vadd.f32 %v358, %v361
        %363 = vst [vmem:[#allocation3] sm:$0xff] %v362
        // Predicated region
        $region41: #{tpu_custom_call.1} parent=27 // pred_check
          %p364 = pneg %p266
        $region42: #{tpu_custom_call.1} parent=27 // pred_check_branch
          %366 = sbr.rel (%p364) target = $region44
        $region43: #{tpu_custom_call.1} parent=27 // pred_region
          %v367 = vld [vmem:[#allocation2] sm:$0xff]
          %368 = vst [vmem:[%s254] sm:$0xff] %v367
          %v369 = vld [vmem:[#allocation3] sm:$0xff]
          %370 = vst [vmem:[%s261] sm:$0xff] %v369
        $region44: #{tpu_custom_call.1} parent=27 // pred_fallthru
          _
        %s371 = sand.u32 %s103, 1
        %s372 = scalar_lea.sflag [#allocation6], %s371
        %s373 = sand.u32 %s103, 1
        %s374 = smul.addr %s373, 8
        %s375 = scalar_lea.vmem [#allocation9], %s374
        %s376 = sand.u32 %s129, 1
        %s377 = scalar_lea.sflag [#allocation11], %s376
        %s378 = sand.u32 %s129, 1
        %s379 = smul.addr %s378, 8
        %s380 = scalar_lea.vmem [#allocation10], %s379
        // Predicated region
        $region45: #{tpu_custom_call.1} parent=27 // pred_check
          %p381 = pneg %p113
        $region46: #{tpu_custom_call.1} parent=27 // pred_check_branch
          %383 = sbr.rel (%p381) target = $region48
        $region47: #{tpu_custom_call.1} parent=27 // pred_region
          %385 = vsyncadd %s372, 0
          %s386 = smul.addr %s31, 8
          %s387 = scalar_lea.hbm %s2, %s386
          %s389 = sshll.u32 %s375, 4
          %s390 = int_to_ptr.vmem [resolvable:$true] %s389
          %s391 = sshll.u32 %s387, 4
          %s392 = int_to_ptr.hbm [resolvable:$true] %s391
          %394 = dma.vmem_to_hbm [thread:$0]  %s390, 128, %s392, %s372
        $region48: #{tpu_custom_call.1} parent=27 // pred_fallthru
          _
        // Predicated region
        $region49: #{tpu_custom_call.1} parent=27 // pred_check
          %p395 = pneg %p139
        $region50: #{tpu_custom_call.1} parent=27 // pred_check_branch
          %397 = sbr.rel (%p395) target = $region52
        $region51: #{tpu_custom_call.1} parent=27 // pred_region
          %399 = vsyncadd %s377, 0
          %s400 = smul.addr %s31, 8
          %s401 = scalar_lea.hbm %s3, %s400
          %s403 = sshll.u32 %s380, 4
          %s404 = int_to_ptr.vmem [resolvable:$true] %s403
          %s405 = sshll.u32 %s401, 4
          %s406 = int_to_ptr.hbm [resolvable:$true] %s405
          %408 = dma.vmem_to_hbm [thread:$0]  %s404, 128, %s406, %s377
        $region52: #{tpu_custom_call.1} parent=27 // pred_fallthru
          _
      $region28: #{tpu_custom_call.1} parent=5 // pred_fallthru
        _
      %p409 = scmp.le.s32.totalorder 2, %s22
      // Predicated region
      $region53: #{tpu_custom_call.1} parent=5 // pred_check
        %p410 = pneg %p409
      $region54: #{tpu_custom_call.1} parent=5 // pred_check_branch
        %412 = sbr.rel (%p410) target = $region56
      $region55: #{tpu_custom_call.1} parent=5 // pred_region
        %s413 = ssub.s32 %s22, 2
        // Predicated region
        $region57: #{tpu_custom_call.1} parent=55 // pred_check
          %p414 = pneg %p119
        $region58: #{tpu_custom_call.1} parent=55 // pred_check_branch
          %416 = sbr.rel (%p414) target = $region60
        $region59: #{tpu_custom_call.1} parent=55 // pred_region
          %s417 = sand.u32 %s104, 1
          %s418 = scalar_lea.sflag [#allocation6], %s417
          %s419 = sand.u32 %s104, 1
          %s420 = smul.addr %s419, 8
          %s421 = scalar_lea.vmem [#allocation9], %s420
          %423 = dma.done %s418, 128
        $region60: #{tpu_custom_call.1} parent=55 // pred_fallthru
          _
        // Predicated region
        $region61: #{tpu_custom_call.1} parent=55 // pred_check
          %p424 = pneg %p145
        $region62: #{tpu_custom_call.1} parent=55 // pred_check_branch
          %426 = sbr.rel (%p424) target = $region64
        $region63: #{tpu_custom_call.1} parent=55 // pred_region
          %s427 = sand.u32 %s130, 1
          %s428 = scalar_lea.sflag [#allocation11], %s427
          %s429 = sand.u32 %s130, 1
          %s430 = smul.addr %s429, 8
          %s431 = scalar_lea.vmem [#allocation10], %s430
          %433 = dma.done %s428, 128
        $region64: #{tpu_custom_call.1} parent=55 // pred_fallthru
          _
      $region56: #{tpu_custom_call.1} parent=5 // pred_fallthru
        _
    $region6: #{tpu_custom_call.1} parent=1 // loop_footer
      %s26 = sadd.s32 1, %s22
    $region7: #{tpu_custom_call.1} parent=1 // loop_footer_branch
      %21 = sbr.rel target = $region3
    $region8: #{tpu_custom_call.1} parent=1 // loop_exit
      _
    %434 = vsyncpa [#allocation5], 1
    %s435 = scalar_lea.sflag [#allocation5], 1
    %436 = vsyncpa %s435, 1
    %437 = vsyncpa [#allocation8], 1
    %s438 = scalar_lea.sflag [#allocation8], 1
    %439 = vsyncpa %s438, 1
    %440 = vsyncpa [#allocation6], 1
    %s441 = scalar_lea.sflag [#allocation6], 1
    %442 = vsyncpa %s441, 1
    %443 = vsyncpa [#allocation11], 1
    %s444 = scalar_lea.sflag [#allocation11], 1
    %445 = vsyncpa %s444, 1

</llo_original>
